<compile_context>
chip_gen: v7x
topology: tpu7x:2x2x1
jax: 0.10.0
libtpu: 0.0.40
codegen_flags: <defaults>
</compile_context>

<pallas_src>
import functools

import jax
import jax.numpy as jnp
import numpy as np
from jax.experimental import pallas as pl
from jax.experimental.pallas import tpu as pltpu

HIDDEN_LAYER = 400
KERNEL = 2
NUM_CLASSES = 2
OUT_PAD = 128          # lane-dense output slab width


def _round_up(x, m):
    return ((x + m - 1) // m) * m


def _cnn_kernel(ids_ref, ew_ref, bconv_ref, wdiff_ref, bdiff_ref, out_ref,
                *, b_blk, t_pad):
    """ids:   (b_blk*T_pad, 2) int32 shifted token ids (-1 = no contribution);
    ew:    (2*V_pad, H_pad) bf16 pre-folded embedding@conv-weight table
           (rows [0, V): tap0 = E@W0^T, rows [V_pad, V_pad+V): tap1 = E@W1^T);
    bconv: (1, H_pad) f32 conv bias;  wdiff: (1, H_pad) f32 lin_w[1]-lin_w[0];
    bdiff: (1,) f32 SMEM scalar lin_b[1]-lin_b[0];
    out:   (b_blk, OUT_PAD) f32 slab, lanes 0/1 = log-probabilities."""
    rows = b_blk * t_pad
    two_vpad = ew_ref.shape[0]
    h_pad = ew_ref.shape[1]

    ids = ids_ref[...]                              # (rows, 2) int32
    id0 = ids[:, 0:1]                               # tap-0 row (or -1)
    id1 = ids[:, 1:2]                               # tap-1 row, offset by V_pad (or -1)

    # In-kernel embedding "gather" + Conv1d(k=2, pad=1) as ONE bf16 MXU matmul:
    # one-hot rows over the stacked table select E[tok]@W0^T + E[tok']@W1^T directly.
    # TODO(synk): at realistic vocab sizes replace this O(V) one-hot matmul with a
    # scalar-prefetch / make_async_copy row gather so the table never sits in VMEM.
    lane = jax.lax.broadcasted_iota(jnp.int32, (rows, two_vpad), 1)
    hcat = ((lane == id0) | (lane == id1)).astype(jnp.bfloat16)       # exact 0/1
    conv = (jnp.dot(hcat, ew_ref[...], preferred_element_type=jnp.float32)
            + bconv_ref[...])                                         # (rows, H_pad) f32

    # Padded time rows (both ids == -1) must not win the max pool.
    valid = (id0 >= 0) | (id1 >= 0)                                   # (rows, 1)
    conv = jnp.where(valid, conv, jnp.finfo(jnp.float32).min)

    # Global max-pool over time: tile-aligned reshape (rows % 8 == 0, H_pad % 128 == 0)
    # + one vector reduction -> free relayout, no VMEM copy.
    pooled = jnp.max(conv.reshape(b_blk, t_pad, h_pad), axis=1)       # (b_blk, H_pad)

    # 2-class head: only d = logit1 - logit0 is needed.  No (H_pad, 2) MXU pass.
    d = (jnp.sum(pooled * wdiff_ref[...], axis=-1, keepdims=True)
         + bdiff_ref[0])                                              # (b_blk, 1)

    # log p0 = -softplus(d), log p1 = d - softplus(d)
    sp = jnp.maximum(d, 0.0) + jnp.log1p(jnp.exp(-jnp.abs(d)))

    # Lane-dense output slab: broadcast select over the lane axis, no concatenate.
    col = jax.lax.broadcasted_iota(jnp.int32, (b_blk, out_ref.shape[1]), 1)
    out_ref[...] = jnp.where(col == 1, d, 0.0) - sp


def cnn_forward(tokens, embeddings, conv_w, conv_b, lin_w, lin_b):
    """tokens: (B, L) int32. Returns (B, 2) float32 log-probabilities."""
    B, L = tokens.shape
    V, E = embeddings.shape
    H = conv_w.shape[0]
    T = L + (KERNEL - 1)                 # conv output length with padding = KERNEL-1
    T_pad = _round_up(T, 8)              # sublane-aligned time axis
    V_pad = _round_up(V, 64)             # 2*V_pad is a multiple of 128 (lane-aligned K)
    H_pad = _round_up(H, 128)            # lane-dense conv/pool width

    # Hard invariant: the in-kernel max-pool reshape must stay (8,128)-tile aligned,
    # otherwise it silently materializes a VMEM copy.
    assert T_pad % 8 == 0 and H_pad % 128 == 0

    # --- integer index prep (tiny int32 work; no float gather round trip) ---
    t_idx = jnp.arange(T_pad)
    g0 = jnp.take(tokens, jnp.clip(t_idx - 1, 0, L - 1), axis=1)          # (B, T_pad)
    id0 = jnp.where((t_idx >= 1) & (t_idx <= L), g0, -1)                  # W0 tap
    g1 = jnp.take(tokens, jnp.clip(t_idx, 0, L - 1), axis=1)
    id1 = jnp.where(t_idx <= L - 1, g1 + V_pad, -1)                       # W1 tap (offset block)
    ids = jnp.stack([id0.reshape(-1), id1.reshape(-1)],
                    axis=1).astype(jnp.int32)                             # (B*T_pad, 2)

    # --- one-time weight folding (would be done at load time in production) ---
    # EW = [E @ W0^T ; E @ W1^T], bf16; no block-diagonal duplication of the table.
    ew = jnp.zeros((2 * V_pad, H_pad), jnp.float32)
    ew = ew.at[:V, :H].set(embeddings @ conv_w[:, :, 0].T)
    ew = ew.at[V_pad:V_pad + V, :H].set(embeddings @ conv_w[:, :, 1].T)
    ew = ew.astype(jnp.bfloat16)
    bconv = jnp.zeros((1, H_pad), jnp.float32).at[0, :H].set(conv_b)
    wdiff = jnp.zeros((1, H_pad), jnp.float32).at[0, :H].set(lin_w[1] - lin_w[0])
    bdiff = (lin_b[1] - lin_b[0]).reshape(1).astype(jnp.float32)

    # --- batch-block grid: weights pinned, only ids/output move per step ---
    # Aim for >=256 matmul rows per step at production batch; degenerate to one block here.
    rows_target = 256
    B_blk = min(B, max(1, rows_target // T_pad))
    while B % B_blk:
        B_blk -= 1
    n_blocks = B // B_blk

    kernel = functools.partial(_cnn_kernel, b_blk=B_blk, t_pad=T_pad)
    grid_spec = pltpu.PrefetchScalarGridSpec(
        num_scalar_prefetch=0,
        grid=(n_blocks,),
        in_specs=[
            pl.BlockSpec((B_blk * T_pad, 2), lambda b: (b, 0)),            # ids (per block)
            pl.BlockSpec((2 * V_pad, H_pad), lambda b: (0, 0)),            # EW (resident)
            pl.BlockSpec((1, H_pad), lambda b: (0, 0)),                    # conv bias
            pl.BlockSpec((1, H_pad), lambda b: (0, 0)),                    # w_diff
            pl.BlockSpec(memory_space=pltpu.MemorySpace.SMEM),             # b_diff scalar
        ],
        out_specs=pl.BlockSpec((B_blk, OUT_PAD), lambda b: (b, 0)),
    )
    # TODO(synk): when scaling vocab/batch, set pltpu.CompilerParams(vmem_limit_bytes=...)
    # explicitly (v5e scoped default 16 MiB; v7x has only 64 MiB physical per TC).
    out_padded = pl.pallas_call(
        kernel,
        out_shape=jax.ShapeDtypeStruct((B, OUT_PAD), jnp.float32),
        grid_spec=grid_spec,
        compiler_params=pltpu.CompilerParams(dimension_semantics=("parallel",)),
    )(ids, ew, bconv, wdiff, bdiff)
    return out_padded[:, :NUM_CLASSES]


def cnn_reference(tokens, embeddings, conv_w, conv_b, lin_w, lin_b):
    """Pure-JAX reference matching the PyTorch forward (full f32)."""
    L = tokens.shape[1]
    T = L + (KERNEL - 1)
    x = embeddings[tokens]                                         # (B, L, E)
    xp = jnp.pad(x, ((0, 0), (KERNEL - 1, KERNEL - 1), (0, 0)))
    conv = (jnp.einsum('ble,he->blh', xp[:, 0:T], conv_w[:, :, 0])
            + jnp.einsum('ble,he->blh', xp[:, 1:T + 1], conv_w[:, :, 1])
            + conv_b)                                              # (B, T, H)
    pooled = jnp.max(conv, axis=1)                                 # (B, H)
    logits = pooled @ lin_w.T + lin_b                              # (B, 2)
    return jax.nn.log_softmax(logits, axis=1)


if __name__ == "__main__":
    # Small, deterministic shapes consistent with the module.
    B, L = 2, 8          # batch of token sequences
    V, E = 50, 32        # vocab size, embedding dim
    H = HIDDEN_LAYER     # 400

    key = jax.random.PRNGKey(0)
    k_emb, k_tok, k_cw, k_cb, k_lw, k_lb = jax.random.split(key, 6)

    embeddings = jax.random.normal(k_emb, (V, E), dtype=jnp.float32)
    tokens = jax.random.randint(k_tok, (B, L), 0, V, dtype=jnp.int32)

    # PyTorch-style uniform init bounds (deterministic, not a checkpoint load).
    kc = 1.0 / np.sqrt(E * KERNEL)
    conv_w = jax.random.uniform(k_cw, (H, E, KERNEL), jnp.float32, -kc, kc)
    conv_b = jax.random.uniform(k_cb, (H,), jnp.float32, -kc, kc)
    kl = 1.0 / np.sqrt(H)
    lin_w = jax.random.uniform(k_lw, (NUM_CLASSES, H), jnp.float32, -kl, kl)
    lin_b = jax.random.uniform(k_lb, (NUM_CLASSES,), jnp.float32, -kl, kl)

    out = cnn_forward(tokens, embeddings, conv_w, conv_b, lin_w, lin_b)
    out = jax.block_until_ready(out)

    ref = cnn_reference(tokens, embeddings, conv_w, conv_b, lin_w, lin_b)
    # Tolerance accounts for the bf16 storage of the folded embedding@conv table.
    np.testing.assert_allclose(np.asarray(out), np.asarray(ref),
                               rtol=2e-2, atol=2e-2)
    print("KERNEL_OK")
</pallas_src>

<mosaic_0001>
module attributes {stable_mosaic.version = 11 : i64} {
  func.func @_cnn_kernel(%arg0: i32, %arg1: memref<32x2xi32, #tpu.memory_space<vmem>>, %arg2: memref<128x512xbf16, #tpu.memory_space<vmem>>, %arg3: memref<1x512xf32, #tpu.memory_space<vmem>>, %arg4: memref<1x512xf32, #tpu.memory_space<vmem>>, %arg5: memref<1xf32, #tpu.memory_space<smem>>, %arg6: memref<2x128xf32, #tpu.memory_space<vmem>>) attributes {dimension_semantics = [#tpu.dimension_semantics<parallel>], iteration_bounds = array<i64: 1>, scalar_prefetch = 0 : i64, scratch_operands = 0 : i64, tpu.core_type = #tpu.core_type<tc>, window_params = [{transform_indices = @transform_0, window_bounds = array<i64: 32, 2>}, {pipeline_mode = #tpu.pipeline_mode<synchronous>, transform_indices = @transform_1, window_bounds = array<i64: 128, 512>}, {pipeline_mode = #tpu.pipeline_mode<synchronous>, transform_indices = @transform_2, window_bounds = array<i64: 1, 512>}, {pipeline_mode = #tpu.pipeline_mode<synchronous>, transform_indices = @transform_3, window_bounds = array<i64: 1, 512>}, {transform_indices = @transform_4, window_bounds = array<i64: 1>}, {transform_indices = @transform_5, window_bounds = array<i64: 2, 128>}]} {
    %c0 = arith.constant 0 : index
    %c0_0 = arith.constant 0 : index
    %0 = vector.load %arg1[%c0, %c0_0] : memref<32x2xi32, #tpu.memory_space<vmem>>, vector<32x2xi32>
    %1 = vector.extract_strided_slice %0 {offsets = [0, 0], sizes = [32, 1], strides = [1, 1]} : vector<32x2xi32> to vector<32x1xi32>
    %2 = vector.extract_strided_slice %0 {offsets = [0, 1], sizes = [32, 1], strides = [1, 1]} : vector<32x2xi32> to vector<32x1xi32>
    %3 = tpu.iota {dimensions = array<i32: 1>} : vector<32x128xi32>
    %4 = vector.broadcast %1 : vector<32x1xi32> to vector<32x128xi32>
    %5 = arith.cmpi eq, %3, %4 : vector<32x128xi32>
    %6 = vector.broadcast %2 : vector<32x1xi32> to vector<32x128xi32>
    %7 = arith.cmpi eq, %3, %6 : vector<32x128xi32>
    %8 = arith.ori %5, %7 : vector<32x128xi1>
    %9 = arith.extui %8 : vector<32x128xi1> to vector<32x128xi32>
    %10 = arith.sitofp %9 : vector<32x128xi32> to vector<32x128xf32>
    %11 = arith.truncf %10 : vector<32x128xf32> to vector<32x128xbf16>
    %c0_1 = arith.constant 0 : index
    %c0_2 = arith.constant 0 : index
    %12 = vector.load %arg2[%c0_1, %c0_2] : memref<128x512xbf16, #tpu.memory_space<vmem>>, vector<128x512xbf16>
    %cst = arith.constant dense<0.000000e+00> : vector<32x512xf32>
    %13 = tpu.matmul %11, %12, %cst {dimension_numbers = #tpu.dot_dimension_numbers<[1], [0], [0], [1], [0, 0, 1, 1], [], []>} : vector<32x128xbf16>, vector<128x512xbf16>, vector<32x512xf32> -> vector<32x512xf32>
    %c0_3 = arith.constant 0 : index
    %c0_4 = arith.constant 0 : index
    %14 = vector.load %arg3[%c0_3, %c0_4] : memref<1x512xf32, #tpu.memory_space<vmem>>, vector<1x512xf32>
    %15 = vector.broadcast %14 : vector<1x512xf32> to vector<32x512xf32>
    %16 = arith.addf %13, %15 : vector<32x512xf32>
    %c0_i32 = arith.constant 0 : i32
    %17 = vector.broadcast %c0_i32 : i32 to vector<32x1xi32>
    %18 = arith.cmpi sge, %1, %17 : vector<32x1xi32>
    %c0_i32_5 = arith.constant 0 : i32
    %19 = vector.broadcast %c0_i32_5 : i32 to vector<32x1xi32>
    %20 = arith.cmpi sge, %2, %19 : vector<32x1xi32>
    %21 = arith.ori %18, %20 : vector<32x1xi1>
    %cst_6 = arith.constant -3.40282347E+38 : f32
    %22 = vector.shape_cast %21 : vector<32x1xi1> to vector<32x1xi1>
    %23 = vector.broadcast %22 : vector<32x1xi1> to vector<32x512xi1>
    %24 = vector.broadcast %cst_6 : f32 to vector<32x512xf32>
    %25 = arith.select %23, %16, %24 : vector<32x512xi1>, vector<32x512xf32>
    %26 = vector.shape_cast %25 : vector<32x512xf32> to vector<2x16x512xf32>
    %cst_7 = arith.constant dense<0xFF800000> : vector<2x512xf32>
    %27 = vector.multi_reduction <maximumf>, %26, %cst_7 [1] : vector<2x16x512xf32> to vector<2x512xf32>
    %c0_8 = arith.constant 0 : index
    %c0_9 = arith.constant 0 : index
    %28 = vector.load %arg4[%c0_8, %c0_9] : memref<1x512xf32, #tpu.memory_space<vmem>>, vector<1x512xf32>
    %29 = vector.broadcast %28 : vector<1x512xf32> to vector<2x512xf32>
    %30 = arith.mulf %27, %29 : vector<2x512xf32>
    %cst_10 = arith.constant dense<0.000000e+00> : vector<2xf32>
    %31 = vector.multi_reduction <add>, %30, %cst_10 [1] : vector<2x512xf32> to vector<2xf32>
    %32 = vector.shape_cast %31 : vector<2xf32> to vector<2x1xf32>
    %c0_11 = arith.constant 0 : index
    %33 = memref.load %arg5[%c0_11] : memref<1xf32, #tpu.memory_space<smem>>
    %34 = vector.broadcast %33 : f32 to vector<2x1xf32>
    %35 = arith.addf %32, %34 : vector<2x1xf32>
    %cst_12 = arith.constant 0.000000e+00 : f32
    %36 = vector.broadcast %cst_12 : f32 to vector<2x1xf32>
    %37 = arith.maximumf %35, %36 : vector<2x1xf32>
    %38 = math.absf %35 : vector<2x1xf32>
    %cst_13 = arith.constant 0.000000e+00 : f32
    %39 = vector.broadcast %cst_13 : f32 to vector<2x1xf32>
    %40 = arith.subf %39, %38 : vector<2x1xf32>
    %41 = math.exp %40 : vector<2x1xf32>
    %42 = math.log1p %41 : vector<2x1xf32>
    %43 = arith.addf %37, %42 : vector<2x1xf32>
    %44 = tpu.iota {dimensions = array<i32: 1>} : vector<2x128xi32>
    %c1_i32 = arith.constant 1 : i32
    %45 = vector.broadcast %c1_i32 : i32 to vector<2x128xi32>
    %46 = arith.cmpi eq, %44, %45 : vector<2x128xi32>
    %cst_14 = arith.constant 0.000000e+00 : f32
    %47 = vector.shape_cast %35 : vector<2x1xf32> to vector<2x1xf32>
    %48 = vector.broadcast %47 : vector<2x1xf32> to vector<2x128xf32>
    %49 = vector.broadcast %cst_14 : f32 to vector<2x128xf32>
    %50 = arith.select %46, %48, %49 : vector<2x128xi1>, vector<2x128xf32>
    %51 = vector.broadcast %43 : vector<2x1xf32> to vector<2x128xf32>
    %52 = arith.subf %50, %51 : vector<2x128xf32>
    %c0_15 = arith.constant 0 : index
    %c0_16 = arith.constant 0 : index
    %53 = vector.load %arg6[%c0_15, %c0_16] : memref<2x128xf32, #tpu.memory_space<vmem>>, vector<2x128xf32>
    tpu.vector_store %arg6[%c0_15, %c0_16], %52 {strides = array<i32>} : memref<2x128xf32, #tpu.memory_space<vmem>>, vector<2x128xf32>,
    return
  }
  func.func @transform_0(%arg0: i32) -> (i32, i32) {
    %c0_i32 = arith.constant 0 : i32
    %c0_i32_0 = arith.constant 0 : i32
    return %arg0, %c0_i32 : i32, i32
  }
  func.func @transform_1(%arg0: i32) -> (i32, i32) {
    %c0_i32 = arith.constant 0 : i32
    %c0_i32_0 = arith.constant 0 : i32
    %c0_i32_1 = arith.constant 0 : i32
    return %c0_i32, %c0_i32_0 : i32, i32
  }
  func.func @transform_2(%arg0: i32) -> (i32, i32) {
    %c0_i32 = arith.constant 0 : i32
    %c0_i32_0 = arith.constant 0 : i32
    %c0_i32_1 = arith.constant 0 : i32
    return %c0_i32, %c0_i32_0 : i32, i32
  }
  func.func @transform_3(%arg0: i32) -> (i32, i32) {
    %c0_i32 = arith.constant 0 : i32
    %c0_i32_0 = arith.constant 0 : i32
    %c0_i32_1 = arith.constant 0 : i32
    return %c0_i32, %c0_i32_0 : i32, i32
  }
  func.func @transform_4(%arg0: i32) -> i32 {
    %c0_i32 = arith.constant 0 : i32
    %c0_i32_0 = arith.constant 0 : i32
    return %c0_i32 : i32
  }
  func.func @transform_5(%arg0: i32) -> (i32, i32) {
    %c0_i32 = arith.constant 0 : i32
    %c0_i32_0 = arith.constant 0 : i32
    return %arg0, %c0_i32 : i32, i32
  }
}

</mosaic_0001>

<llo_original>
// kernel: tpu_custom_call.1
$region0: #{tpu_custom_call.1}
  #allocation0 [shape = 'u32[]', space=smem, size = 0x4, offset = 0x4, fixed_abs, tag = 'smem constant byte address 0x4 - core index']
  #allocation1 [shape = 'u32[144,128]{1,0:T(1,128)}', space=vmem, size = 0x12000, scoped, tag = 'internal scratch']
  #allocation2 [shape = 'f32[1]{0:T(128)S(6)}', space=smem, size = 0x200, scoped, tag = 'scoped memory for tpu_custom_call.1']
  %s0 = inlined_call_operand.vmem [shape: s32[32,2], index: 0, kind: input, shape index: {}]
  %s1 = inlined_call_operand.hbm [shape: bf16[128,512], index: 1, kind: input, shape index: {}]
  %s2 = inlined_call_operand.vmem [shape: f32[1,512], index: 2, kind: input, shape index: {}]
  %s3 = inlined_call_operand.vmem [shape: f32[1,512], index: 3, kind: input, shape index: {}]
  %s4 = inlined_call_operand.<no memory space> [shape: f32[1], index: 4, kind: input, shape index: {}]
  %s5 = inlined_call_operand.hbm [shape: f32[2,128], index: 5, kind: output, shape index: {}]
  %s6 = sld [smem:[#allocation0]]
  $region34: #{tpu_custom_call.1} parent=0
    _
  %s8 = ssub.s32 1, %s6
  %s9 = scalar_select 0, %s8, %s6
  %10 = sst [smem:[#allocation2]] %s4
  $region1: #{tpu_custom_call.1} parent=0
    #allocation3 [shape = 'u8[131072]{0}', space=vmem, size = 0x20000, scoped, tag = 'input window, operand 1, single buffered']
    #allocation4 [shape = 's32[1]{0}', space=sflag, size = 0x4, scoped, tag = 'scoped memory for tpu_custom_call.1']
    #allocation5 [shape = 's32[1]{0}', space=sflag, size = 0x4, scoped, tag = 'scoped memory for tpu_custom_call.1']
    #allocation6 [shape = 'u8[1024]{0}', space=vmem, size = 0x400, scoped, tag = 'output window, operand 0, single buffered']
    %11 = vsyncpa [#allocation4], 0
    %12 = vsyncpa [#allocation5], 0
    // Predicated region
    $region2: #{tpu_custom_call.1} parent=1 // pred_check
      _
    $region3: #{tpu_custom_call.1} parent=1 // pred_check_branch
      %14 = sbr.rel (0) target = $region5
    $region4: #{tpu_custom_call.1} parent=1 // pred_region
      _
    $region5: #{tpu_custom_call.1} parent=1 // pred_fallthru
      _
    // Predicated region
    $region6: #{tpu_custom_call.1} parent=1 // pred_check
      _
    $region7: #{tpu_custom_call.1} parent=1 // pred_check_branch
      %16 = sbr.rel (0) target = $region9
    $region8: #{tpu_custom_call.1} parent=1 // pred_region
      %s18 = ssub.s32 4096, 4096
      %19 = vsyncadd [#allocation4], %s18
      %s20 = sshll.u32 [#allocation3], 4
      %s21 = int_to_ptr.vmem [resolvable:$true] %s20
      %26 = dma.hbm_to_vmem [thread:$0]  %s1, 4096, %s21, [#allocation4], 256, 256, 16
    $region9: #{tpu_custom_call.1} parent=1 // pred_fallthru
      _
    // Predicated region
    $region10: #{tpu_custom_call.1} parent=1 // pred_check
      _
    $region11: #{tpu_custom_call.1} parent=1 // pred_check_branch
      %28 = sbr.rel (0) target = $region13
    $region12: #{tpu_custom_call.1} parent=1 // pred_region
      _
    $region13: #{tpu_custom_call.1} parent=1 // pred_fallthru
      _
    // Predicated region
    $region14: #{tpu_custom_call.1} parent=1 // pred_check
      _
    $region15: #{tpu_custom_call.1} parent=1 // pred_check_branch
      %30 = sbr.rel (0) target = $region17
    $region16: #{tpu_custom_call.1} parent=1 // pred_region
      _
    $region17: #{tpu_custom_call.1} parent=1 // pred_fallthru
      _
    // Predicated region
    $region18: #{tpu_custom_call.1} parent=1 // pred_check
      _
    $region19: #{tpu_custom_call.1} parent=1 // pred_check_branch
      %32 = sbr.rel (0) target = $region21
    $region20: #{tpu_custom_call.1} parent=1 // pred_region
      _
    $region21: #{tpu_custom_call.1} parent=1 // pred_fallthru
      _
    // Predicated region
    $region22: #{tpu_custom_call.1} parent=1 // pred_check
      _
    $region23: #{tpu_custom_call.1} parent=1 // pred_check_branch
      %34 = sbr.rel (0) target = $region25
    $region24: #{tpu_custom_call.1} parent=1 // pred_region
      %35 = dma.done [#allocation4], 4096
    $region25: #{tpu_custom_call.1} parent=1 // pred_fallthru
      _
    %v37 = vld [vmem:[%s0] sm:$0xff]
    %v38 = vld [vmem:[%s0 + $0x8] sm:$0xff]
    %v39 = vld [vmem:[%s0 + $0x10] sm:$0xff]
    %v40 = vld [vmem:[%s0 + $0x18] sm:$0xff]
    %v41 = vlaneseq
    %v42 = vand.u32 %v41, 127
    %43 = vset.pattern.permute.xlu0 0
    %44 = vperm.xlu0 %43, %v37
    %v45 = vpop.permute.xlu0 %44
    %46 = vset.pattern.permute.xlu0 0
    %47 = vperm.xlu0 %46, %v38
    %v48 = vpop.permute.xlu0 %47
    %49 = vset.pattern.permute.xlu0 0
    %50 = vperm.xlu0 %49, %v39
    %v51 = vpop.permute.xlu0 %50
    %52 = vset.pattern.permute.xlu0 0
    %53 = vperm.xlu0 %52, %v40
    %v54 = vpop.permute.xlu0 %53
    %vm55 = vcmp.eq.s32.totalorder %v42, %v45
    %vm56 = vcmp.eq.s32.totalorder %v42, %v48
    %vm57 = vcmp.eq.s32.totalorder %v42, %v51
    %vm58 = vcmp.eq.s32.totalorder %v42, %v54
    %59 = vset.pattern.permute.xlu0 1
    %60 = vperm.xlu0 %59, %v37
    %v61 = vpop.permute.xlu0 %60
    %62 = vset.pattern.permute.xlu0 1
    %63 = vperm.xlu0 %62, %v38
    %v64 = vpop.permute.xlu0 %63
    %65 = vset.pattern.permute.xlu0 1
    %66 = vperm.xlu0 %65, %v39
    %v67 = vpop.permute.xlu0 %66
    %68 = vset.pattern.permute.xlu0 1
    %69 = vperm.xlu0 %68, %v40
    %v70 = vpop.permute.xlu0 %69
    %vm71 = vcmp.eq.s32.totalorder %v42, %v61
    %vm72 = vcmp.eq.s32.totalorder %v42, %v64
    %vm73 = vcmp.eq.s32.totalorder %v42, %v67
    %vm74 = vcmp.eq.s32.totalorder %v42, %v70
    %vm75 = vmor %vm55, %vm71
    %vm76 = vmor %vm56, %vm72
    %vm77 = vmor %vm57, %vm73
    %vm78 = vmor %vm58, %vm74
    %v79 = vsel %vm75, 1, 0
    %v80 = vsel %vm76, 1, 0
    %v81 = vsel %vm77, 1, 0
    %v82 = vsel %vm78, 1, 0
    %v83 = vcvt.s32.f32 %v79
    %v84 = vcvt.s32.f32 %v80
    %v85 = vcvt.s32.f32 %v81
    %v86 = vcvt.s32.f32 %v82
    %v87 = vpack.c.bf16 %v84, %v83
    %v88 = vpack.c.bf16 %v86, %v85
    %v89 = vld [vmem:[#allocation3] sm:$0xff]
    %v90 = vld [vmem:[#allocation3 + $0x8] sm:$0xff]
    %v91 = vld [vmem:[#allocation3 + $0x10] sm:$0xff]
    %v92 = vld [vmem:[#allocation3 + $0x18] sm:$0xff]
    %v93 = vld [vmem:[#allocation3 + $0x20] sm:$0xff]
    %v94 = vld [vmem:[#allocation3 + $0x28] sm:$0xff]
    %v95 = vld [vmem:[#allocation3 + $0x30] sm:$0xff]
    %v96 = vld [vmem:[#allocation3 + $0x38] sm:$0xff]
    %v97 = vld [vmem:[#allocation3 + $0x40] sm:$0xff]
    %v98 = vld [vmem:[#allocation3 + $0x48] sm:$0xff]
    %v99 = vld [vmem:[#allocation3 + $0x50] sm:$0xff]
    %v100 = vld [vmem:[#allocation3 + $0x58] sm:$0xff]
    %v101 = vld [vmem:[#allocation3 + $0x60] sm:$0xff]
    %v102 = vld [vmem:[#allocation3 + $0x68] sm:$0xff]
    %v103 = vld [vmem:[#allocation3 + $0x70] sm:$0xff]
    %v104 = vld [vmem:[#allocation3 + $0x78] sm:$0xff]
    %v105 = vld [vmem:[#allocation3 + $0x80] sm:$0xff]
    %v106 = vld [vmem:[#allocation3 + $0x88] sm:$0xff]
    %v107 = vld [vmem:[#allocation3 + $0x90] sm:$0xff]
    %v108 = vld [vmem:[#allocation3 + $0x98] sm:$0xff]
    %v109 = vld [vmem:[#allocation3 + $0xa0] sm:$0xff]
    %v110 = vld [vmem:[#allocation3 + $0xa8] sm:$0xff]
    %v111 = vld [vmem:[#allocation3 + $0xb0] sm:$0xff]
    %v112 = vld [vmem:[#allocation3 + $0xb8] sm:$0xff]
    %v113 = vld [vmem:[#allocation3 + $0xc0] sm:$0xff]
    %v114 = vld [vmem:[#allocation3 + $0xc8] sm:$0xff]
    %v115 = vld [vmem:[#allocation3 + $0xd0] sm:$0xff]
    %v116 = vld [vmem:[#allocation3 + $0xd8] sm:$0xff]
    %v117 = vld [vmem:[#allocation3 + $0xe0] sm:$0xff]
    %v118 = vld [vmem:[#allocation3 + $0xe8] sm:$0xff]
    %v119 = vld [vmem:[#allocation3 + $0xf0] sm:$0xff]
    %v120 = vld [vmem:[#allocation3 + $0xf8] sm:$0xff]
    %v121 = vld [vmem:[%s2] sm:$0xf]
    %v123 = vlaneseq
    %v124 = vshrl.u32 %v123, 7
    %v125 = vsub.s32 0, %v124
    %v126 = vrot.slane %v121, %v125
    %v127 = vlaneseq
    %v128 = vshrl.u32 %v127, 7
    %v129 = vsub.s32 1, %v128
    %v130 = vrot.slane %v121, %v129
    %v131 = vlaneseq
    %v132 = vshrl.u32 %v131, 7
    %v133 = vsub.s32 2, %v132
    %v134 = vrot.slane %v121, %v133
    %v135 = vlaneseq
    %v136 = vshrl.u32 %v135, 7
    %v137 = vsub.s32 3, %v136
    %v138 = vrot.slane %v121, %v137
    %v175 = vunpack.c.l.b16 %v89
    %v176 = vunpack.c.h.b16 %v89
    %v177 = vunpack.c.l.b16 %v90
    %v178 = vunpack.c.h.b16 %v90
    %v179 = vunpack.c.l.b16 %v91
    %v180 = vunpack.c.h.b16 %v91
    %v181 = vunpack.c.l.b16 %v92
    %v182 = vunpack.c.h.b16 %v92
    %v183 = vunpack.c.l.b16 %v93
    %v184 = vunpack.c.h.b16 %v93
    %v185 = vunpack.c.l.b16 %v94
    %v186 = vunpack.c.h.b16 %v94
    %v187 = vunpack.c.l.b16 %v95
    %v188 = vunpack.c.h.b16 %v95
    %v189 = vunpack.c.l.b16 %v96
    %v190 = vunpack.c.h.b16 %v96
    %v191 = vunpack.c.l.b16 %v97
    %v192 = vunpack.c.h.b16 %v97
    %v193 = vunpack.c.l.b16 %v98
    %v194 = vunpack.c.h.b16 %v98
    %v195 = vunpack.c.l.b16 %v99
    %v196 = vunpack.c.h.b16 %v99
    %v197 = vunpack.c.l.b16 %v100
    %v198 = vunpack.c.h.b16 %v100
    %v199 = vunpack.c.l.b16 %v101
    %v200 = vunpack.c.h.b16 %v101
    %v201 = vunpack.c.l.b16 %v102
    %v202 = vunpack.c.h.b16 %v102
    %v203 = vunpack.c.l.b16 %v103
    %v204 = vunpack.c.h.b16 %v103
    %v205 = vunpack.c.l.b16 %v104
    %v206 = vunpack.c.h.b16 %v104
    %v207 = vunpack.c.l.b16 %v105
    %v208 = vunpack.c.h.b16 %v105
    %v209 = vunpack.c.l.b16 %v106
    %v210 = vunpack.c.h.b16 %v106
    %v211 = vunpack.c.l.b16 %v107
    %v212 = vunpack.c.h.b16 %v107
    %v213 = vunpack.c.l.b16 %v108
    %v214 = vunpack.c.h.b16 %v108
    %v215 = vunpack.c.l.b16 %v109
    %v216 = vunpack.c.h.b16 %v109
    %v217 = vunpack.c.l.b16 %v110
    %v218 = vunpack.c.h.b16 %v110
    %v219 = vunpack.c.l.b16 %v111
    %v220 = vunpack.c.h.b16 %v111
    %v221 = vunpack.c.l.b16 %v112
    %v222 = vunpack.c.h.b16 %v112
    %v223 = vunpack.c.l.b16 %v113
    %v224 = vunpack.c.h.b16 %v113
    %v225 = vunpack.c.l.b16 %v114
    %v226 = vunpack.c.h.b16 %v114
    %v227 = vunpack.c.l.b16 %v115
    %v228 = vunpack.c.h.b16 %v115
    %v229 = vunpack.c.l.b16 %v116
    %v230 = vunpack.c.h.b16 %v116
    %v231 = vunpack.c.l.b16 %v117
    %v232 = vunpack.c.h.b16 %v117
    %v233 = vunpack.c.l.b16 %v118
    %v234 = vunpack.c.h.b16 %v118
    %v235 = vunpack.c.l.b16 %v119
    %v236 = vunpack.c.h.b16 %v119
    %v237 = vunpack.c.l.b16 %v120
    %v238 = vunpack.c.h.b16 %v120
    %v239 = vpack.c.b16 %v179, %v175
    %v240 = vpack.c.b16 %v180, %v176
    %v241 = vpack.c.b16 %v181, %v177
    %v242 = vpack.c.b16 %v182, %v178
    %v243 = vpack.c.b16 %v187, %v183
    %v244 = vpack.c.b16 %v188, %v184
    %v245 = vpack.c.b16 %v189, %v185
    %v246 = vpack.c.b16 %v190, %v186
    %v247 = vpack.c.b16 %v195, %v191
    %v248 = vpack.c.b16 %v196, %v192
    %v249 = vpack.c.b16 %v197, %v193
    %v250 = vpack.c.b16 %v198, %v194
    %v251 = vpack.c.b16 %v203, %v199
    %v252 = vpack.c.b16 %v204, %v200
    %v253 = vpack.c.b16 %v205, %v201
    %v254 = vpack.c.b16 %v206, %v202
    %v255 = vpack.c.b16 %v211, %v207
    %v256 = vpack.c.b16 %v212, %v208
    %v257 = vpack.c.b16 %v213, %v209
    %v258 = vpack.c.b16 %v214, %v210
    %v259 = vpack.c.b16 %v219, %v215
    %v260 = vpack.c.b16 %v220, %v216
    %v261 = vpack.c.b16 %v221, %v217
    %v262 = vpack.c.b16 %v222, %v218
    %v263 = vpack.c.b16 %v227, %v223
    %v264 = vpack.c.b16 %v228, %v224
    %v265 = vpack.c.b16 %v229, %v225
    %v266 = vpack.c.b16 %v230, %v226
    %v267 = vpack.c.b16 %v235, %v231
    %v268 = vpack.c.b16 %v236, %v232
    %v269 = vpack.c.b16 %v237, %v233
    %v270 = vpack.c.b16 %v238, %v234
    %303 = vmatprep.subr.bf16.mxu0 %v240
    %304 = vmatpush1.bf16.msra.mxu0 %v239
    %305 = vmatprep.subr.bf16.mxu0 %v244
    %306 = vmatpush1.bf16.msra.mxu0 %v243
    %307 = vmatprep.subr.bf16.mxu0 %v248
    %308 = vmatpush1.bf16.msra.mxu0 %v247
    %309 = vmatprep.subr.bf16.mxu0 %v252
    %310 = vmatpush1.bf16.msra.mxu0 %v251
    %311 = vmatprep.subr.bf16.mxu0 %v256
    %312 = vmatpush1.bf16.msra.mxu0 %v255
    %313 = vmatprep.subr.bf16.mxu0 %v260
    %314 = vmatpush1.bf16.msra.mxu0 %v259
    %315 = vmatprep.subr.bf16.mxu0 %v264
    %316 = vmatpush1.bf16.msra.mxu0 %v263
    %317 = vmatprep.subr.bf16.mxu0 %v268
    %318 = vmatpush1.bf16.msra.mxu0 %v267
    %319 = vmatprep.subr.bf16.mxu0 0
    %320 = vmatpush1.bf16.msra.mxu0 0
    %321 = vmatprep.subr.bf16.mxu0 0
    %322 = vmatpush1.bf16.msra.mxu0 0
    %323 = vmatprep.subr.bf16.mxu0 0
    %324 = vmatpush1.bf16.msra.mxu0 0
    %325 = vmatprep.subr.bf16.mxu0 0
    %326 = vmatpush1.bf16.msra.mxu0 0
    %327 = vmatprep.subr.bf16.mxu0 0
    %328 = vmatpush1.bf16.msra.mxu0 0
    %329 = vmatprep.subr.bf16.mxu0 0
    %330 = vmatpush1.bf16.msra.mxu0 0
    %331 = vmatprep.subr.bf16.mxu0 0
    %332 = vmatpush1.bf16.msra.mxu0 0
    %333 = vmatprep.subr.bf16.mxu0 0
    %334 = vmatpush1.bf16.msra.mxu0 0
    %335 = vmatprep.mubr.bf16.mxu0 0
    %336 = vmatmul.mubr.bf16.gmra.mrb[0].mxu0 %v87
    %v337 = vpop.f32.mrb[0].mxu0
    %v338 = vadd.f32 %v126, %v337
    %v339 = vpop.f32.mrb[0].mxu0
    %v340 = vadd.f32 %v130, %v339
    %v341 = vpop.f32.mrb[0].mxu0
    %v342 = vadd.f32 %v126, %v341
    %v343 = vpop.f32.mrb[0].mxu0
    %v344 = vadd.f32 %v130, %v343
    %345 = vmatprep.mubr.bf16.mxu0 0
    %346 = vmatmul.mubr.bf16.gmra.mrb[0].mxu0 %v88
    %v347 = vpop.f32.mrb[0].mxu0
    %v348 = vadd.f32 %v126, %v347
    %v349 = vpop.f32.mrb[0].mxu0
    %v350 = vadd.f32 %v130, %v349
    %v351 = vpop.f32.mrb[0].mxu0
    %v352 = vadd.f32 %v126, %v351
    %v353 = vpop.f32.mrb[0].mxu0
    %v354 = vadd.f32 %v130, %v353
    %355 = vdwg.mxu0
    %356 = vmatprep.subr.bf16.mxu0 %v242
    %357 = vmatpush1.bf16.msra.mxu0 %v241
    %358 = vmatprep.subr.bf16.mxu0 %v246
    %359 = vmatpush1.bf16.msra.mxu0 %v245
    %360 = vmatprep.subr.bf16.mxu0 %v250
    %361 = vmatpush1.bf16.msra.mxu0 %v249
    %362 = vmatprep.subr.bf16.mxu0 %v254
    %363 = vmatpush1.bf16.msra.mxu0 %v253
    %364 = vmatprep.subr.bf16.mxu0 %v258
    %365 = vmatpush1.bf16.msra.mxu0 %v257
    %366 = vmatprep.subr.bf16.mxu0 %v262
    %367 = vmatpush1.bf16.msra.mxu0 %v261
    %368 = vmatprep.subr.bf16.mxu0 %v266
    %369 = vmatpush1.bf16.msra.mxu0 %v265
    %370 = vmatprep.subr.bf16.mxu0 %v270
    %371 = vmatpush1.bf16.msra.mxu0 %v269
    %372 = vmatprep.subr.bf16.mxu0 0
    %373 = vmatpush1.bf16.msra.mxu0 0
    %374 = vmatprep.subr.bf16.mxu0 0
    %375 = vmatpush1.bf16.msra.mxu0 0
    %376 = vmatprep.subr.bf16.mxu0 0
    %377 = vmatpush1.bf16.msra.mxu0 0
    %378 = vmatprep.subr.bf16.mxu0 0
    %379 = vmatpush1.bf16.msra.mxu0 0
    %380 = vmatprep.subr.bf16.mxu0 0
    %381 = vmatpush1.bf16.msra.mxu0 0
    %382 = vmatprep.subr.bf16.mxu0 0
    %383 = vmatpush1.bf16.msra.mxu0 0
    %384 = vmatprep.subr.bf16.mxu0 0
    %385 = vmatpush1.bf16.msra.mxu0 0
    %386 = vmatprep.subr.bf16.mxu0 0
    %387 = vmatpush1.bf16.msra.mxu0 0
    %388 = vmatprep.mubr.bf16.mxu0 0
    %389 = vmatmul.mubr.bf16.gmra.mrb[0].mxu0 %v87
    %v390 = vpop.f32.mrb[0].mxu0
    %v391 = vadd.f32 %v134, %v390
    %v392 = vpop.f32.mrb[0].mxu0
    %v393 = vadd.f32 %v138, %v392
    %v394 = vpop.f32.mrb[0].mxu0
    %v395 = vadd.f32 %v134, %v394
    %v396 = vpop.f32.mrb[0].mxu0
    %v397 = vadd.f32 %v138, %v396
    %398 = vmatprep.mubr.bf16.mxu0 0
    %399 = vmatmul.mubr.bf16.gmra.mrb[0].mxu0 %v88
    %v400 = vpop.f32.mrb[0].mxu0
    %v401 = vadd.f32 %v134, %v400
    %v402 = vpop.f32.mrb[0].mxu0
    %v403 = vadd.f32 %v138, %v402
    %v404 = vpop.f32.mrb[0].mxu0
    %v405 = vadd.f32 %v134, %v404
    %v406 = vpop.f32.mrb[0].mxu0
    %v407 = vadd.f32 %v138, %v406
    %408 = vdwg.mxu0
    %vm409 = vcmp.ge.s32.totalorder %v37, 0
    %vm410 = vcmp.ge.s32.totalorder %v38, 0
    %vm411 = vcmp.ge.s32.totalorder %v39, 0
    %vm412 = vcmp.ge.s32.totalorder %v40, 0
    %v413 = vsel %vm409, 1, 0
    %v414 = vsel %vm410, 1, 0
    %v415 = vsel %vm411, 1, 0
    %v416 = vsel %vm412, 1, 0
    %417 = vrot.lane.b32.xlu0 %v413, 127
    %v418 = vpop.permute.xlu0 %417
    %419 = vrot.lane.b32.xlu0 %v414, 127
    %v420 = vpop.permute.xlu0 %419
    %421 = vrot.lane.b32.xlu0 %v415, 127
    %v422 = vpop.permute.xlu0 %421
    %423 = vrot.lane.b32.xlu0 %v416, 127
    %v424 = vpop.permute.xlu0 %423
    %vm425 = vcmp.ne.s32.totalorder %v418, 0
    %vm426 = vcmp.ne.s32.totalorder %v420, 0
    %vm427 = vcmp.ne.s32.totalorder %v422, 0
    %vm428 = vcmp.ne.s32.totalorder %v424, 0
    %vm429 = vmor %vm409, %vm425
    %vm430 = vmor %vm410, %vm426
    %vm431 = vmor %vm411, %vm427
    %vm432 = vmor %vm412, %vm428
    %v433 = vsel %vm429, 1, 0
    %v434 = vsel %vm430, 1, 0
    %v435 = vsel %vm431, 1, 0
    %v436 = vsel %vm432, 1, 0
    %437 = vset.pattern.permute.xlu0 0
    %438 = vperm.xlu0 %437, %v433
    %v439 = vpop.permute.xlu0 %438
    %440 = vset.pattern.permute.xlu0 0
    %441 = vperm.xlu0 %440, %v434
    %v442 = vpop.permute.xlu0 %441
    %443 = vset.pattern.permute.xlu0 0
    %444 = vperm.xlu0 %443, %v435
    %v445 = vpop.permute.xlu0 %444
    %446 = vset.pattern.permute.xlu0 0
    %447 = vperm.xlu0 %446, %v436
    %v448 = vpop.permute.xlu0 %447
    %vm449 = vcmp.eq.s32.totalorder %v439, 1
    %vm450 = vcmp.eq.s32.totalorder %v442, 1
    %vm451 = vcmp.eq.s32.totalorder %v445, 1
    %vm452 = vcmp.eq.s32.totalorder %v448, 1
    %v453 = vsel %vm449, %v338, -3.4028235e+38
    %v454 = vsel %vm449, %v340, -3.4028235e+38
    %v455 = vsel %vm449, %v391, -3.4028235e+38
    %v456 = vsel %vm449, %v393, -3.4028235e+38
    %v457 = vsel %vm450, %v342, -3.4028235e+38
    %v458 = vsel %vm450, %v344, -3.4028235e+38
    %v459 = vsel %vm450, %v395, -3.4028235e+38
    %v460 = vsel %vm450, %v397, -3.4028235e+38
    %v461 = vsel %vm451, %v348, -3.4028235e+38
    %v462 = vsel %vm451, %v350, -3.4028235e+38
    %v463 = vsel %vm451, %v401, -3.4028235e+38
    %v464 = vsel %vm451, %v403, -3.4028235e+38
    %v465 = vsel %vm452, %v352, -3.4028235e+38
    %v466 = vsel %vm452, %v354, -3.4028235e+38
    %v467 = vsel %vm452, %v405, -3.4028235e+38
    %v468 = vsel %vm452, %v407, -3.4028235e+38
    %v469 = vmax.f32 %v453, %v457
    %v470 = vrot.slane %v469, 4
    %v471 = vmax.f32 %v469, %v470
    %v472 = vrot.slane %v471, 2
    %v473 = vmax.f32 %v471, %v472
    %v474 = vrot.slane %v473, 1
    %v475 = vmax.f32 %v473, %v474
    %v476 = vmax.f32 %v454, %v458
    %v477 = vrot.slane %v476, 4
    %v478 = vmax.f32 %v476, %v477
    %v479 = vrot.slane %v478, 2
    %v480 = vmax.f32 %v478, %v479
    %v481 = vrot.slane %v480, 1
    %v482 = vmax.f32 %v480, %v481
    %v483 = vmax.f32 %v455, %v459
    %v484 = vrot.slane %v483, 4
    %v485 = vmax.f32 %v483, %v484
    %v486 = vrot.slane %v485, 2
    %v487 = vmax.f32 %v485, %v486
    %v488 = vrot.slane %v487, 1
    %v489 = vmax.f32 %v487, %v488
    %v490 = vmax.f32 %v456, %v460
    %v491 = vrot.slane %v490, 4
    %v492 = vmax.f32 %v490, %v491
    %v493 = vrot.slane %v492, 2
    %v494 = vmax.f32 %v492, %v493
    %v495 = vrot.slane %v494, 1
    %v496 = vmax.f32 %v494, %v495
    %v497 = vmax.f32 %v461, %v465
    %v498 = vrot.slane %v497, 4
    %v499 = vmax.f32 %v497, %v498
    %v500 = vrot.slane %v499, 2
    %v501 = vmax.f32 %v499, %v500
    %v502 = vrot.slane %v501, 1
    %v503 = vmax.f32 %v501, %v502
    %v504 = vmax.f32 %v462, %v466
    %v505 = vrot.slane %v504, 4
    %v506 = vmax.f32 %v504, %v505
    %v507 = vrot.slane %v506, 2
    %v508 = vmax.f32 %v506, %v507
    %v509 = vrot.slane %v508, 1
    %v510 = vmax.f32 %v508, %v509
    %v511 = vmax.f32 %v463, %v467
    %v512 = vrot.slane %v511, 4
    %v513 = vmax.f32 %v511, %v512
    %v514 = vrot.slane %v513, 2
    %v515 = vmax.f32 %v513, %v514
    %v516 = vrot.slane %v515, 1
    %v517 = vmax.f32 %v515, %v516
    %v518 = vmax.f32 %v464, %v468
    %v519 = vrot.slane %v518, 4
    %v520 = vmax.f32 %v518, %v519
    %v521 = vrot.slane %v520, 2
    %v522 = vmax.f32 %v520, %v521
    %v523 = vrot.slane %v522, 1
    %v524 = vmax.f32 %v522, %v523
    %v525 = vld [vmem:[%s3] sm:$0xf]
    %v527 = vlaneseq
    %v528 = vshrl.u32 %v527, 7
    %v529 = vsub.s32 0, %v528
    %v530 = vrot.slane %v525, %v529
    %v531 = vlaneseq
    %v532 = vshrl.u32 %v531, 7
    %v533 = vsub.s32 1, %v532
    %v534 = vrot.slane %v525, %v533
    %v535 = vlaneseq
    %v536 = vshrl.u32 %v535, 7
    %v537 = vsub.s32 2, %v536
    %v538 = vrot.slane %v525, %v537
    %v539 = vlaneseq
    %v540 = vshrl.u32 %v539, 7
    %v541 = vsub.s32 3, %v540
    %v542 = vrot.slane %v525, %v541
    %v547 = vmul.f32 %v475, %v530
    %v548 = vmul.f32 %v482, %v534
    %v549 = vmul.f32 %v489, %v538
    %v550 = vmul.f32 %v496, %v542
    %v551 = vmul.f32 %v503, %v530
    %v552 = vmul.f32 %v510, %v534
    %v553 = vmul.f32 %v517, %v538
    %v554 = vmul.f32 %v524, %v542
    %v563 = vrot.slane %v551, 7
    %vm564 = vcmask 1041409
    %v565 = vsel %vm564, %v563, %v547
    %v566 = vrot.slane %v552, 7
    %v567 = vsel %vm564, %v566, %v548
    %v568 = vrot.slane %v553, 7
    %v569 = vsel %vm564, %v568, %v549
    %v570 = vrot.slane %v554, 7
    %v571 = vsel %vm564, %v570, %v550
    %vm576 = vcmask 1041408
    %v577 = vsel %vm576, %v565, 0.0
    %v578 = vsel %vm576, %v567, 0.0
    %v579 = vadd.f32 %v577, %v578
    %v580 = vsel %vm576, %v569, 0.0
    %v581 = vadd.f32 %v579, %v580
    %v582 = vsel %vm576, %v571, 0.0
    %v583 = vadd.f32 %v581, %v582
    %584 = vadd.xlane.f32.xlu0 %v583
    %v585 = vpop.xlane.xlu0 %584
    %s586 = sld [smem:[#allocation2]]
    %v587 = vstv %s586
    %v588 = vadd.f32 %v585, %v587
    %v589 = vmax.f32 %v588, 0.0
    %v590 = vand.u32 2147483647, %v588
    %v591 = vsub.f32 0.0, %v590
    %v592 = vmul.f32 %v591, 1.442695
    %v593 = vpow.pop %v592
    %v594 = vadd.f32 %v593, 1.0
    %v595 = vlog2.pop %v594
    %v596 = vmul.f32 %v595, 0.6931472
    %v597 = vmul.f32 -0.5, %v593
    %v598 = vadd.f32 %v597, 1.0
    %v599 = vmul.f32 %v598, %v593
    %v600 = vand.u32 2147483647, %v593
    %vm601 = vcmp.lt.f32.partialorder %v600, 0.0004427343
    %v602 = vsel %vm601, %v599, %v596
    %v603 = vadd.f32 %v589, %v602
    %vm604 = vcmp.eq.s32.totalorder %v42, 1
    %v605 = vsel %vm604, %v588, 0.0
    %v606 = vsub.f32 %v605, %v603
    %607 = vst [vmem:[#allocation6] sm:$0x3] %v606
    // Predicated region
    $region26: #{tpu_custom_call.1} parent=1 // pred_check
      _
    $region27: #{tpu_custom_call.1} parent=1 // pred_check_branch
      %609 = sbr.rel (0) target = $region29
    $region28: #{tpu_custom_call.1} parent=1 // pred_region
      %s611 = ssub.s32 32, 32
      %612 = vsyncadd [#allocation5], %s611
      %s614 = sshll.u32 [#allocation6], 4
      %s615 = int_to_ptr.vmem [resolvable:$true] %s614
      %617 = dma.vmem_to_hbm [thread:$0]  %s615, 32, %s5, [#allocation5]
    $region29: #{tpu_custom_call.1} parent=1 // pred_fallthru
      _
    // Predicated region
    $region30: #{tpu_custom_call.1} parent=1 // pred_check
      _
    $region31: #{tpu_custom_call.1} parent=1 // pred_check_branch
      %619 = sbr.rel (0) target = $region33
    $region32: #{tpu_custom_call.1} parent=1 // pred_region
      %620 = dma.done [#allocation5], 32
    $region33: #{tpu_custom_call.1} parent=1 // pred_fallthru
      _
    %621 = vsyncpa [#allocation4], 1
    %622 = vsyncpa [#allocation5], 1

</llo_original>
